<compile_context>
chip_gen: v5e
topology: v5e:2x2
jax: 0.10.0
libtpu: 0.0.40
codegen_flags: <defaults>
</compile_context>

<pallas_src>
import jax
import jax.numpy as jnp
from jax.experimental import pallas as pl
from jax.experimental.pallas import tpu as pltpu

LN_EPS = 1e-5  # torch.nn.LayerNorm default


def _layernorm(x, gamma, beta):
    mu = jnp.mean(x, axis=-1, keepdims=True)
    xc = x - mu
    var = jnp.mean(xc * xc, axis=-1, keepdims=True)
    return xc * jax.lax.rsqrt(var + LN_EPS) * gamma + beta


def _gelu_exact(x):
    # torch.nn.GELU() default approximate='none' (erf based).  Weakly typed
    # python scalars keep the compute dtype of x (f32 or bf16).
    return 0.5 * x * (1.0 + jax.lax.erf(x * 0.7071067811865476))


def _make_kernel(elementwise_bf16):
    gelu_dtype = jnp.bfloat16 if elementwise_bf16 else jnp.float32

    def kernel(x_ref, pin_ref, w1_ref, w2_ref, pout_ref, o_ref):
        # x_ref: (tm, in_dim) tile of flattened tokens
        # pin_ref:  (3, in_dim)  rows = [ln1_gamma, ln1_beta, bias1]
        # pout_ref: (3, out_dim) rows = [bias2, ln2_gamma, ln2_beta]
        x = x_ref[...].astype(jnp.float32)

        # Load the small param blocks once, slice in registers.
        pin = pin_ref[...]
        pout = pout_ref[...]
        g1, b1, bb1 = pin[0:1, :], pin[1:2, :], pin[2:3, :]
        bb2, g2, b2 = pout[0:1, :], pout[1:2, :], pout[2:3, :]

        # LayerNorm(in_dim) in f32
        xn = _layernorm(x, g1, b1)

        # Linear(in_dim, in_dim): bf16 operands on the MXU, f32 accumulation
        h = jnp.dot(xn.astype(jnp.bfloat16), w1_ref[...],
                    preferred_element_type=jnp.float32) + bb1

        # exact GELU (bf16 on v6e/v7x where the VPU is bf16-capable, f32 on v5e)
        h = _gelu_exact(h.astype(gelu_dtype))

        # Linear(in_dim, out_dim): bf16 operands on the MXU, f32 accumulation
        y = jnp.dot(h.astype(jnp.bfloat16), w2_ref[...],
                    preferred_element_type=jnp.float32) + bb2

        # LayerNorm(out_dim) in f32
        o_ref[...] = _layernorm(y, g2, b2).astype(o_ref.dtype)

    return kernel


def _round_up(n, m):
    return (n + m - 1) // m * m


def _tpu_config(N):
    """(row_tile, elementwise_bf16, vmem_capacity_bytes) for this generation."""
    try:
        kind = jax.devices()[0].device_kind.lower()
    except Exception:
        kind = ""
    is_v7 = ("v7" in kind) or ("7x" in kind)
    elementwise_bf16 = ("v6" in kind) or is_v7          # bf16 VPU: v6e/v7x only

    fallback_cap = (64 << 20) if is_v7 else (128 << 20)
    try:
        cap = int(pltpu.get_tpu_info().vmem_capacity_bytes)
        vmem_cap = min(cap, fallback_cap) if cap > 0 else fallback_cap
    except Exception:
        vmem_cap = fallback_cap

    # v5e/v6e: big row tiles amortize the ~0.35us/step overhead (128 MiB VMEM);
    # v7x: smaller tiles under the 64 MiB/TC budget, and ensure >=2 grid steps
    # so dimension_semantics=("parallel",) uses both TensorCores.
    base_tm = 256 if is_v7 else 512
    tm = min(base_tm, _round_up(N, 8))
    if is_v7 and N > 8:
        tm = min(tm, _round_up(pl.cdiv(N, 2), 8))
    return tm, elementwise_bf16, vmem_cap


def mlp_proj(image_embeds, params, *, out_dtype=None):
    """image_embeds: (B, S, in_dim). Returns (B, S, out_dim)."""
    g1, b1, w1, bb1, w2, bb2, g2, b2 = params
    B, S, in_dim = image_embeds.shape
    out_dim = w2.shape[1]
    N = B * S
    out_dtype = image_embeds.dtype if out_dtype is None else out_dtype

    tm, elementwise_bf16, vmem_cap = _tpu_config(N)
    grid = (pl.cdiv(N, tm),)  # ragged last tile is masked by Pallas (row-indep math)

    x2d = image_embeds.reshape(N, in_dim)   # no pad / slice round trip

    # bf16 weights feed the MXU directly and halve weight VMEM/DMA traffic.
    w1b = w1.astype(jnp.bfloat16)
    w2b = w2.astype(jnp.bfloat16)
    # Pack the six small vectors into two blocks (fewer DMA descriptors).
    p_in = jnp.stack([g1, b1, bb1]).astype(jnp.float32)    # (3, in_dim)
    p_out = jnp.stack([bb2, g2, b2]).astype(jnp.float32)   # (3, out_dim)

    x_bytes = x2d.dtype.itemsize
    o_bytes = jnp.dtype(out_dtype).itemsize
    weight_bytes = (in_dim * in_dim + in_dim * out_dim) * 2
    param_bytes = 3 * (in_dim + out_dim) * 4
    # Conservative estimate (covers the double-buffered-weights fallback too):
    # weights + params, double-buffered x/out row tiles, f32 intermediates.
    est = (2 * weight_bytes + 2 * param_bytes
           + 2 * tm * in_dim * x_bytes
           + 2 * tm * out_dim * o_bytes
           + tm * (2 * in_dim + 2 * out_dim) * 4)
    ceiling = vmem_cap - (8 << 20)
    vmem_limit = int(min(max(est * 3 // 2 + (4 << 20), 32 << 20), ceiling))

    cost = pl.CostEstimate(
        flops=2 * N * in_dim * (in_dim + out_dim),
        transcendentals=N * in_dim,  # erf inside the GELU
        bytes_accessed=(N * in_dim * x_bytes + N * out_dim * o_bytes
                        + weight_bytes + param_bytes))

    kernel = _make_kernel(elementwise_bf16)

    def build(single_buffer_weights):
        resident = (dict(pipeline_mode=pl.Buffered(1))
                    if single_buffer_weights else {})
        return pl.pallas_call(
            kernel,
            out_shape=jax.ShapeDtypeStruct((N, out_dim), out_dtype),
            grid_spec=pltpu.PrefetchScalarGridSpec(
                num_scalar_prefetch=0,
                grid=grid,
                in_specs=[
                    pl.BlockSpec((tm, in_dim), lambda i: (i, 0)),               # x tile
                    pl.BlockSpec((3, in_dim), lambda i: (0, 0), **resident),    # ln1/bias1
                    pl.BlockSpec((in_dim, in_dim), lambda i: (0, 0), **resident),   # W1 (in,in)
                    pl.BlockSpec((in_dim, out_dim), lambda i: (0, 0), **resident),  # W2 (in,out)
                    pl.BlockSpec((3, out_dim), lambda i: (0, 0), **resident),   # bias2/ln2
                ],
                out_specs=pl.BlockSpec((tm, out_dim), lambda i: (i, 0)),
            ),
            compiler_params=pltpu.CompilerParams(
                dimension_semantics=("parallel",),
                vmem_limit_bytes=vmem_limit),
            cost_estimate=cost,
        )

    try:
        out2d = build(True)(x2d, p_in, w1b, w2b, p_out)
    except Exception:
        # pipeline_mode=pl.Buffered(1) not supported by this JAX version:
        # fall back to default (double-buffered) weight specs.
        out2d = build(False)(x2d, p_in, w1b, w2b, p_out)

    return out2d.reshape(B, S, out_dim)


def init_params(key, in_dim, out_dim):
    k1, k2, k3, k4 = jax.random.split(key, 4)
    # LayerNorm(in_dim): weight=1, bias=0 (torch default), kept f32
    g1 = jnp.ones((in_dim,), jnp.float32)
    b1 = jnp.zeros((in_dim,), jnp.float32)
    # Linear(in_dim, in_dim): stored as (in, out) = W.T, bf16
    w1 = (jax.random.normal(k1, (in_dim, in_dim), jnp.float32)
          * (1.0 / jnp.sqrt(in_dim))).astype(jnp.bfloat16)
    bb1 = jax.random.normal(k2, (in_dim,), jnp.float32) * 0.01
    # Linear(in_dim, out_dim): stored as (in, out) = W.T, bf16
    w2 = (jax.random.normal(k3, (in_dim, out_dim), jnp.float32)
          * (1.0 / jnp.sqrt(in_dim))).astype(jnp.bfloat16)
    bb2 = jax.random.normal(k4, (out_dim,), jnp.float32) * 0.01
    # LayerNorm(out_dim)
    g2 = jnp.ones((out_dim,), jnp.float32)
    b2 = jnp.zeros((out_dim,), jnp.float32)
    return (g1, b1, w1, bb1, w2, bb2, g2, b2)


def mlp_proj_ref(image_embeds, params, *, elementwise_bf16=False):
    """Pure-JAX reference using the same bf16-operand / f32-accumulate math."""
    g1, b1, w1, bb1, w2, bb2, g2, b2 = params
    x = _layernorm(image_embeds.astype(jnp.float32), g1, b1)
    h = jnp.dot(x.astype(jnp.bfloat16), w1.astype(jnp.bfloat16),
                preferred_element_type=jnp.float32) + bb1
    h = _gelu_exact(h.astype(jnp.bfloat16 if elementwise_bf16 else jnp.float32))
    y = jnp.dot(h.astype(jnp.bfloat16), w2.astype(jnp.bfloat16),
                preferred_element_type=jnp.float32) + bb2
    return _layernorm(y, g2, b2)


if __name__ == "__main__":
    # Small, lane-aligned demo shapes (feature dims multiples of 128).
    B, S, in_dim, out_dim = 2, 8, 128, 256
    key = jax.random.PRNGKey(0)
    kx, kp = jax.random.split(key)
    x = jax.random.normal(kx, (B, S, in_dim), jnp.float32)
    params = init_params(kp, in_dim, out_dim)

    out = jax.block_until_ready(mlp_proj(x, params))

    _, elementwise_bf16, _ = _tpu_config(B * S)
    ref = mlp_proj_ref(x, params, elementwise_bf16=elementwise_bf16)

    assert out.shape == (B, S, out_dim)
    err = jnp.max(jnp.abs(out.astype(jnp.float32) - ref))
    assert jnp.allclose(out.astype(jnp.float32), ref, atol=2e-2, rtol=2e-2), \
        f"max err {err}"
    print("KERNEL_OK")
</pallas_src>

<mosaic_0001>
module attributes {stable_mosaic.version = 11 : i64} {
  func.func @kernel(%arg0: i32, %arg1: memref<16x128xf32, #tpu.memory_space<vmem>>, %arg2: memref<3x128xf32, #tpu.memory_space<vmem>>, %arg3: memref<128x128xbf16, #tpu.memory_space<vmem>>, %arg4: memref<128x256xbf16, #tpu.memory_space<vmem>>, %arg5: memref<3x256xf32, #tpu.memory_space<vmem>>, %arg6: memref<16x256xf32, #tpu.memory_space<vmem>>) attributes {dimension_semantics = [#tpu.dimension_semantics<parallel>], iteration_bounds = array<i64: 1>, scalar_prefetch = 0 : i64, scratch_operands = 0 : i64, tpu.core_type = #tpu.core_type<tc>, window_params = [{transform_indices = @transform_0, window_bounds = array<i64: 16, 128>}, {pipeline_mode = #tpu.pipeline_mode<synchronous>, transform_indices = @transform_1, window_bounds = array<i64: 3, 128>}, {pipeline_mode = #tpu.pipeline_mode<synchronous>, transform_indices = @transform_2, window_bounds = array<i64: 128, 128>}, {pipeline_mode = #tpu.pipeline_mode<synchronous>, transform_indices = @transform_3, window_bounds = array<i64: 128, 256>}, {pipeline_mode = #tpu.pipeline_mode<synchronous>, transform_indices = @transform_4, window_bounds = array<i64: 3, 256>}, {transform_indices = @transform_5, window_bounds = array<i64: 16, 256>}]} {
    %c0 = arith.constant 0 : index
    %c0_0 = arith.constant 0 : index
    %0 = vector.load %arg1[%c0, %c0_0] : memref<16x128xf32, #tpu.memory_space<vmem>>, vector<16x128xf32>
    %c0_1 = arith.constant 0 : index
    %c0_2 = arith.constant 0 : index
    %1 = vector.load %arg2[%c0_1, %c0_2] : memref<3x128xf32, #tpu.memory_space<vmem>>, vector<3x128xf32>
    %c0_3 = arith.constant 0 : index
    %c0_4 = arith.constant 0 : index
    %2 = vector.load %arg5[%c0_3, %c0_4] : memref<3x256xf32, #tpu.memory_space<vmem>>, vector<3x256xf32>
    %3 = vector.extract_strided_slice %1 {offsets = [0, 0], sizes = [1, 128], strides = [1, 1]} : vector<3x128xf32> to vector<1x128xf32>
    %4 = vector.extract_strided_slice %1 {offsets = [1, 0], sizes = [1, 128], strides = [1, 1]} : vector<3x128xf32> to vector<1x128xf32>
    %5 = vector.extract_strided_slice %1 {offsets = [2, 0], sizes = [1, 128], strides = [1, 1]} : vector<3x128xf32> to vector<1x128xf32>
    %6 = vector.extract_strided_slice %2 {offsets = [0, 0], sizes = [1, 256], strides = [1, 1]} : vector<3x256xf32> to vector<1x256xf32>
    %7 = vector.extract_strided_slice %2 {offsets = [1, 0], sizes = [1, 256], strides = [1, 1]} : vector<3x256xf32> to vector<1x256xf32>
    %8 = vector.extract_strided_slice %2 {offsets = [2, 0], sizes = [1, 256], strides = [1, 1]} : vector<3x256xf32> to vector<1x256xf32>
    %cst = arith.constant dense<0.000000e+00> : vector<16xf32>
    %9 = vector.multi_reduction <add>, %0, %cst [1] : vector<16x128xf32> to vector<16xf32>
    %10 = vector.shape_cast %9 : vector<16xf32> to vector<16x1xf32>
    %cst_5 = arith.constant 1.280000e+02 : f32
    %11 = vector.broadcast %cst_5 : f32 to vector<16x1xf32>
    %12 = arith.divf %10, %11 : vector<16x1xf32>
    %13 = vector.broadcast %12 : vector<16x1xf32> to vector<16x128xf32>
    %14 = arith.subf %0, %13 : vector<16x128xf32>
    %15 = arith.mulf %14, %14 : vector<16x128xf32>
    %cst_6 = arith.constant dense<0.000000e+00> : vector<16xf32>
    %16 = vector.multi_reduction <add>, %15, %cst_6 [1] : vector<16x128xf32> to vector<16xf32>
    %17 = vector.shape_cast %16 : vector<16xf32> to vector<16x1xf32>
    %cst_7 = arith.constant 1.280000e+02 : f32
    %18 = vector.broadcast %cst_7 : f32 to vector<16x1xf32>
    %19 = arith.divf %17, %18 : vector<16x1xf32>
    %cst_8 = arith.constant 9.99999974E-6 : f32
    %20 = vector.broadcast %cst_8 : f32 to vector<16x1xf32>
    %21 = arith.addf %19, %20 : vector<16x1xf32>
    %22 = math.rsqrt %21 : vector<16x1xf32>
    %23 = vector.broadcast %22 : vector<16x1xf32> to vector<16x128xf32>
    %24 = arith.mulf %14, %23 : vector<16x128xf32>
    %25 = vector.broadcast %3 : vector<1x128xf32> to vector<16x128xf32>
    %26 = arith.mulf %24, %25 : vector<16x128xf32>
    %27 = vector.broadcast %4 : vector<1x128xf32> to vector<16x128xf32>
    %28 = arith.addf %26, %27 : vector<16x128xf32>
    %29 = arith.truncf %28 : vector<16x128xf32> to vector<16x128xbf16>
    %c0_9 = arith.constant 0 : index
    %c0_10 = arith.constant 0 : index
    %30 = vector.load %arg3[%c0_9, %c0_10] : memref<128x128xbf16, #tpu.memory_space<vmem>>, vector<128x128xbf16>
    %cst_11 = arith.constant dense<0.000000e+00> : vector<16x128xf32>
    %31 = tpu.matmul %29, %30, %cst_11 {dimension_numbers = #tpu.dot_dimension_numbers<[1], [0], [0], [1], [0, 0, 1, 1], [], []>} : vector<16x128xbf16>, vector<128x128xbf16>, vector<16x128xf32> -> vector<16x128xf32>
    %32 = vector.broadcast %5 : vector<1x128xf32> to vector<16x128xf32>
    %33 = arith.addf %31, %32 : vector<16x128xf32>
    %cst_12 = arith.constant 5.000000e-01 : f32
    %34 = vector.broadcast %cst_12 : f32 to vector<16x128xf32>
    %35 = arith.mulf %34, %33 : vector<16x128xf32>
    %cst_13 = arith.constant 0.707106769 : f32
    %36 = vector.broadcast %cst_13 : f32 to vector<16x128xf32>
    %37 = arith.mulf %33, %36 : vector<16x128xf32>
    %38 = math.erf %37 : vector<16x128xf32>
    %cst_14 = arith.constant 1.000000e+00 : f32
    %39 = vector.broadcast %cst_14 : f32 to vector<16x128xf32>
    %40 = arith.addf %39, %38 : vector<16x128xf32>
    %41 = arith.mulf %35, %40 : vector<16x128xf32>
    %42 = arith.truncf %41 : vector<16x128xf32> to vector<16x128xbf16>
    %c0_15 = arith.constant 0 : index
    %c0_16 = arith.constant 0 : index
    %43 = vector.load %arg4[%c0_15, %c0_16] : memref<128x256xbf16, #tpu.memory_space<vmem>>, vector<128x256xbf16>
    %cst_17 = arith.constant dense<0.000000e+00> : vector<16x256xf32>
    %44 = tpu.matmul %42, %43, %cst_17 {dimension_numbers = #tpu.dot_dimension_numbers<[1], [0], [0], [1], [0, 0, 1, 1], [], []>} : vector<16x128xbf16>, vector<128x256xbf16>, vector<16x256xf32> -> vector<16x256xf32>
    %45 = vector.broadcast %6 : vector<1x256xf32> to vector<16x256xf32>
    %46 = arith.addf %44, %45 : vector<16x256xf32>
    %cst_18 = arith.constant dense<0.000000e+00> : vector<16xf32>
    %47 = vector.multi_reduction <add>, %46, %cst_18 [1] : vector<16x256xf32> to vector<16xf32>
    %48 = vector.shape_cast %47 : vector<16xf32> to vector<16x1xf32>
    %cst_19 = arith.constant 2.560000e+02 : f32
    %49 = vector.broadcast %cst_19 : f32 to vector<16x1xf32>
    %50 = arith.divf %48, %49 : vector<16x1xf32>
    %51 = vector.broadcast %50 : vector<16x1xf32> to vector<16x256xf32>
    %52 = arith.subf %46, %51 : vector<16x256xf32>
    %53 = arith.mulf %52, %52 : vector<16x256xf32>
    %cst_20 = arith.constant dense<0.000000e+00> : vector<16xf32>
    %54 = vector.multi_reduction <add>, %53, %cst_20 [1] : vector<16x256xf32> to vector<16xf32>
    %55 = vector.shape_cast %54 : vector<16xf32> to vector<16x1xf32>
    %cst_21 = arith.constant 2.560000e+02 : f32
    %56 = vector.broadcast %cst_21 : f32 to vector<16x1xf32>
    %57 = arith.divf %55, %56 : vector<16x1xf32>
    %cst_22 = arith.constant 9.99999974E-6 : f32
    %58 = vector.broadcast %cst_22 : f32 to vector<16x1xf32>
    %59 = arith.addf %57, %58 : vector<16x1xf32>
    %60 = math.rsqrt %59 : vector<16x1xf32>
    %61 = vector.broadcast %60 : vector<16x1xf32> to vector<16x256xf32>
    %62 = arith.mulf %52, %61 : vector<16x256xf32>
    %63 = vector.broadcast %7 : vector<1x256xf32> to vector<16x256xf32>
    %64 = arith.mulf %62, %63 : vector<16x256xf32>
    %65 = vector.broadcast %8 : vector<1x256xf32> to vector<16x256xf32>
    %66 = arith.addf %64, %65 : vector<16x256xf32>
    %c0_23 = arith.constant 0 : index
    %c0_24 = arith.constant 0 : index
    %67 = vector.load %arg6[%c0_23, %c0_24] : memref<16x256xf32, #tpu.memory_space<vmem>>, vector<16x256xf32>
    tpu.vector_store %arg6[%c0_23, %c0_24], %66 {strides = array<i32>} : memref<16x256xf32, #tpu.memory_space<vmem>>, vector<16x256xf32>,
    return
  }
  func.func @transform_0(%arg0: i32) -> (i32, i32) {
    %c0_i32 = arith.constant 0 : i32
    %c0_i32_0 = arith.constant 0 : i32
    return %arg0, %c0_i32 : i32, i32
  }
  func.func @transform_1(%arg0: i32) -> (i32, i32) {
    %c0_i32 = arith.constant 0 : i32
    %c0_i32_0 = arith.constant 0 : i32
    %c0_i32_1 = arith.constant 0 : i32
    return %c0_i32, %c0_i32_0 : i32, i32
  }
  func.func @transform_2(%arg0: i32) -> (i32, i32) {
    %c0_i32 = arith.constant 0 : i32
    %c0_i32_0 = arith.constant 0 : i32
    %c0_i32_1 = arith.constant 0 : i32
    return %c0_i32, %c0_i32_0 : i32, i32
  }
  func.func @transform_3(%arg0: i32) -> (i32, i32) {
    %c0_i32 = arith.constant 0 : i32
    %c0_i32_0 = arith.constant 0 : i32
    %c0_i32_1 = arith.constant 0 : i32
    return %c0_i32, %c0_i32_0 : i32, i32
  }
  func.func @transform_4(%arg0: i32) -> (i32, i32) {
    %c0_i32 = arith.constant 0 : i32
    %c0_i32_0 = arith.constant 0 : i32
    %c0_i32_1 = arith.constant 0 : i32
    return %c0_i32, %c0_i32_0 : i32, i32
  }
  func.func @transform_5(%arg0: i32) -> (i32, i32) {
    %c0_i32 = arith.constant 0 : i32
    %c0_i32_0 = arith.constant 0 : i32
    return %arg0, %c0_i32 : i32, i32
  }
}

module attributes {stable_mosaic.version = 11 : i64} {
  func.func @kernel(%arg0: i32, %arg1: memref<16x128xf32, #tpu.memory_space<vmem>>, %arg2: memref<3x128xf32, #tpu.memory_space<vmem>>, %arg3: memref<128x128xbf16, #tpu.memory_space<vmem>>, %arg4: memref<128x256xbf16, #tpu.memory_space<vmem>>, %arg5: memref<3x256xf32, #tpu.memory_space<vmem>>, %arg6: memref<16x256xf32, #tpu.memory_space<vmem>>) attributes {dimension_semantics = [#tpu.dimension_semantics<parallel>], iteration_bounds = array<i64: 1>, scalar_prefetch = 0 : i64, scratch_operands = 0 : i64, tpu.core_type = #tpu.core_type<tc>, window_params = [{transform_indices = @transform_0, window_bounds = array<i64: 16, 128>}, {pipeline_mode = #tpu.pipeline_mode<synchronous>, transform_indices = @transform_1, window_bounds = array<i64: 3, 128>}, {pipeline_mode = #tpu.pipeline_mode<synchronous>, transform_indices = @transform_2, window_bounds = array<i64: 128, 128>}, {pipeline_mode = #tpu.pipeline_mode<synchronous>, transform_indices = @transform_3, window_bounds = array<i64: 128, 256>}, {pipeline_mode = #tpu.pipeline_mode<synchronous>, transform_indices = @transform_4, window_bounds = array<i64: 3, 256>}, {transform_indices = @transform_5, window_bounds = array<i64: 16, 256>}]} {
    %c0 = arith.constant 0 : index
    %c0_0 = arith.constant 0 : index
    %0 = vector.load %arg1[%c0, %c0_0] : memref<16x128xf32, #tpu.memory_space<vmem>>, vector<16x128xf32>
    %c0_1 = arith.constant 0 : index
    %c0_2 = arith.constant 0 : index
    %1 = vector.load %arg2[%c0_1, %c0_2] : memref<3x128xf32, #tpu.memory_space<vmem>>, vector<3x128xf32>
    %c0_3 = arith.constant 0 : index
    %c0_4 = arith.constant 0 : index
    %2 = vector.load %arg5[%c0_3, %c0_4] : memref<3x256xf32, #tpu.memory_space<vmem>>, vector<3x256xf32>
    %3 = vector.extract_strided_slice %1 {offsets = [0, 0], sizes = [1, 128], strides = [1, 1]} : vector<3x128xf32> to vector<1x128xf32>
    %4 = vector.extract_strided_slice %1 {offsets = [1, 0], sizes = [1, 128], strides = [1, 1]} : vector<3x128xf32> to vector<1x128xf32>
    %5 = vector.extract_strided_slice %1 {offsets = [2, 0], sizes = [1, 128], strides = [1, 1]} : vector<3x128xf32> to vector<1x128xf32>
    %6 = vector.extract_strided_slice %2 {offsets = [0, 0], sizes = [1, 256], strides = [1, 1]} : vector<3x256xf32> to vector<1x256xf32>
    %7 = vector.extract_strided_slice %2 {offsets = [1, 0], sizes = [1, 256], strides = [1, 1]} : vector<3x256xf32> to vector<1x256xf32>
    %8 = vector.extract_strided_slice %2 {offsets = [2, 0], sizes = [1, 256], strides = [1, 1]} : vector<3x256xf32> to vector<1x256xf32>
    %cst = arith.constant dense<0.000000e+00> : vector<16xf32>
    %9 = vector.multi_reduction <add>, %0, %cst [1] : vector<16x128xf32> to vector<16xf32>
    %10 = vector.shape_cast %9 : vector<16xf32> to vector<16x1xf32>
    %cst_5 = arith.constant 1.280000e+02 : f32
    %11 = vector.broadcast %cst_5 : f32 to vector<16x1xf32>
    %12 = arith.divf %10, %11 : vector<16x1xf32>
    %13 = vector.broadcast %12 : vector<16x1xf32> to vector<16x128xf32>
    %14 = arith.subf %0, %13 : vector<16x128xf32>
    %15 = arith.mulf %14, %14 : vector<16x128xf32>
    %cst_6 = arith.constant dense<0.000000e+00> : vector<16xf32>
    %16 = vector.multi_reduction <add>, %15, %cst_6 [1] : vector<16x128xf32> to vector<16xf32>
    %17 = vector.shape_cast %16 : vector<16xf32> to vector<16x1xf32>
    %cst_7 = arith.constant 1.280000e+02 : f32
    %18 = vector.broadcast %cst_7 : f32 to vector<16x1xf32>
    %19 = arith.divf %17, %18 : vector<16x1xf32>
    %cst_8 = arith.constant 9.99999974E-6 : f32
    %20 = vector.broadcast %cst_8 : f32 to vector<16x1xf32>
    %21 = arith.addf %19, %20 : vector<16x1xf32>
    %22 = math.rsqrt %21 : vector<16x1xf32>
    %23 = vector.broadcast %22 : vector<16x1xf32> to vector<16x128xf32>
    %24 = arith.mulf %14, %23 : vector<16x128xf32>
    %25 = vector.broadcast %3 : vector<1x128xf32> to vector<16x128xf32>
    %26 = arith.mulf %24, %25 : vector<16x128xf32>
    %27 = vector.broadcast %4 : vector<1x128xf32> to vector<16x128xf32>
    %28 = arith.addf %26, %27 : vector<16x128xf32>
    %29 = arith.truncf %28 : vector<16x128xf32> to vector<16x128xbf16>
    %c0_9 = arith.constant 0 : index
    %c0_10 = arith.constant 0 : index
    %30 = vector.load %arg3[%c0_9, %c0_10] : memref<128x128xbf16, #tpu.memory_space<vmem>>, vector<128x128xbf16>
    %cst_11 = arith.constant dense<0.000000e+00> : vector<16x128xf32>
    %31 = tpu.matmul %29, %30, %cst_11 {dimension_numbers = #tpu.dot_dimension_numbers<[1], [0], [0], [1], [0, 0, 1, 1], [], []>} : vector<16x128xbf16>, vector<128x128xbf16>, vector<16x128xf32> -> vector<16x128xf32>
    %32 = vector.broadcast %5 : vector<1x128xf32> to vector<16x128xf32>
    %33 = arith.addf %31, %32 : vector<16x128xf32>
    %cst_12 = arith.constant 5.000000e-01 : f32
    %34 = vector.broadcast %cst_12 : f32 to vector<16x128xf32>
    %35 = arith.mulf %34, %33 : vector<16x128xf32>
    %cst_13 = arith.constant 0.707106769 : f32
    %36 = vector.broadcast %cst_13 : f32 to vector<16x128xf32>
    %37 = arith.mulf %33, %36 : vector<16x128xf32>
    %38 = math.erf %37 : vector<16x128xf32>
    %cst_14 = arith.constant 1.000000e+00 : f32
    %39 = vector.broadcast %cst_14 : f32 to vector<16x128xf32>
    %40 = arith.addf %39, %38 : vector<16x128xf32>
    %41 = arith.mulf %35, %40 : vector<16x128xf32>
    %42 = arith.truncf %41 : vector<16x128xf32> to vector<16x128xbf16>
    %c0_15 = arith.constant 0 : index
    %c0_16 = arith.constant 0 : index
    %43 = vector.load %arg4[%c0_15, %c0_16] : memref<128x256xbf16, #tpu.memory_space<vmem>>, vector<128x256xbf16>
    %cst_17 = arith.constant dense<0.000000e+00> : vector<16x256xf32>
    %44 = tpu.matmul %42, %43, %cst_17 {dimension_numbers = #tpu.dot_dimension_numbers<[1], [0], [0], [1], [0, 0, 1, 1], [], []>} : vector<16x128xbf16>, vector<128x256xbf16>, vector<16x256xf32> -> vector<16x256xf32>
    %45 = vector.broadcast %6 : vector<1x256xf32> to vector<16x256xf32>
    %46 = arith.addf %44, %45 : vector<16x256xf32>
    %cst_18 = arith.constant dense<0.000000e+00> : vector<16xf32>
    %47 = vector.multi_reduction <add>, %46, %cst_18 [1] : vector<16x256xf32> to vector<16xf32>
    %48 = vector.shape_cast %47 : vector<16xf32> to vector<16x1xf32>
    %cst_19 = arith.constant 2.560000e+02 : f32
    %49 = vector.broadcast %cst_19 : f32 to vector<16x1xf32>
    %50 = arith.divf %48, %49 : vector<16x1xf32>
    %51 = vector.broadcast %50 : vector<16x1xf32> to vector<16x256xf32>
    %52 = arith.subf %46, %51 : vector<16x256xf32>
    %53 = arith.mulf %52, %52 : vector<16x256xf32>
    %cst_20 = arith.constant dense<0.000000e+00> : vector<16xf32>
    %54 = vector.multi_reduction <add>, %53, %cst_20 [1] : vector<16x256xf32> to vector<16xf32>
    %55 = vector.shape_cast %54 : vector<16xf32> to vector<16x1xf32>
    %cst_21 = arith.constant 2.560000e+02 : f32
    %56 = vector.broadcast %cst_21 : f32 to vector<16x1xf32>
    %57 = arith.divf %55, %56 : vector<16x1xf32>
    %cst_22 = arith.constant 9.99999974E-6 : f32
    %58 = vector.broadcast %cst_22 : f32 to vector<16x1xf32>
    %59 = arith.addf %57, %58 : vector<16x1xf32>
    %60 = math.rsqrt %59 : vector<16x1xf32>
    %61 = vector.broadcast %60 : vector<16x1xf32> to vector<16x256xf32>
    %62 = arith.mulf %52, %61 : vector<16x256xf32>
    %63 = vector.broadcast %7 : vector<1x256xf32> to vector<16x256xf32>
    %64 = arith.mulf %62, %63 : vector<16x256xf32>
    %65 = vector.broadcast %8 : vector<1x256xf32> to vector<16x256xf32>
    %66 = arith.addf %64, %65 : vector<16x256xf32>
    %c0_23 = arith.constant 0 : index
    %c0_24 = arith.constant 0 : index
    %67 = vector.load %arg6[%c0_23, %c0_24] : memref<16x256xf32, #tpu.memory_space<vmem>>, vector<16x256xf32>
    tpu.vector_store %arg6[%c0_23, %c0_24], %66 {strides = array<i32>} : memref<16x256xf32, #tpu.memory_space<vmem>>, vector<16x256xf32>,
    return
  }
  func.func @transform_0(%arg0: i32) -> (i32, i32) {
    %c0_i32 = arith.constant 0 : i32
    %c0_i32_0 = arith.constant 0 : i32
    return %arg0, %c0_i32 : i32, i32
  }
  func.func @transform_1(%arg0: i32) -> (i32, i32) {
    %c0_i32 = arith.constant 0 : i32
    %c0_i32_0 = arith.constant 0 : i32
    %c0_i32_1 = arith.constant 0 : i32
    return %c0_i32, %c0_i32_0 : i32, i32
  }
  func.func @transform_2(%arg0: i32) -> (i32, i32) {
    %c0_i32 = arith.constant 0 : i32
    %c0_i32_0 = arith.constant 0 : i32
    %c0_i32_1 = arith.constant 0 : i32
    return %c0_i32, %c0_i32_0 : i32, i32
  }
  func.func @transform_3(%arg0: i32) -> (i32, i32) {
    %c0_i32 = arith.constant 0 : i32
    %c0_i32_0 = arith.constant 0 : i32
    %c0_i32_1 = arith.constant 0 : i32
    return %c0_i32, %c0_i32_0 : i32, i32
  }
  func.func @transform_4(%arg0: i32) -> (i32, i32) {
    %c0_i32 = arith.constant 0 : i32
    %c0_i32_0 = arith.constant 0 : i32
    %c0_i32_1 = arith.constant 0 : i32
    return %c0_i32, %c0_i32_0 : i32, i32
  }
  func.func @transform_5(%arg0: i32) -> (i32, i32) {
    %c0_i32 = arith.constant 0 : i32
    %c0_i32_0 = arith.constant 0 : i32
    return %arg0, %c0_i32 : i32, i32
  }
}

</mosaic_0001>

<llo_original>
// kernel: tpu_custom_call.1
$region0: #{tpu_custom_call.1}
  #allocation0 [shape = 'u32[]', space=smem, size = 0x4, offset = 0x4, fixed_abs, tag = 'smem constant byte address 0x4 - core index']
  #allocation1 [shape = 'u32[72,128]{1,0:T(1,128)}', space=vmem, size = 0x9000, scoped, tag = 'internal scratch']
  %s0 = inlined_call_operand.hbm [shape: f32[16,128], index: 0, kind: input, shape index: {}]
  %s1 = inlined_call_operand.hbm [shape: f32[3,128], index: 1, kind: input, shape index: {}]
  %s2 = inlined_call_operand.hbm [shape: bf16[128,128], index: 2, kind: input, shape index: {}]
  %s3 = inlined_call_operand.hbm [shape: bf16[128,256], index: 3, kind: input, shape index: {}]
  %s4 = inlined_call_operand.hbm [shape: f32[3,256], index: 4, kind: input, shape index: {}]
  %s5 = inlined_call_operand.hbm [shape: f32[16,256], index: 5, kind: output, shape index: {}]
  %s6 = sld [smem:[#allocation0]]
  $region50: #{tpu_custom_call.1} parent=0
    _
  %s8 = ssub.s32 1, %s6
  %s9 = scalar_select 0, %s8, %s6
  $region1: #{tpu_custom_call.1} parent=0
    #allocation2 [shape = 'u8[8192]{0}', space=vmem, size = 0x2000, scoped, tag = 'input window, operand 0, single buffered']
    #allocation3 [shape = 's32[1]{0}', space=sflag, size = 0x4, scoped, tag = 'scoped memory for tpu_custom_call.1']
    #allocation4 [shape = 's32[1]{0}', space=sflag, size = 0x4, scoped, tag = 'scoped memory for tpu_custom_call.1']
    #allocation5 [shape = 'u8[2048]{0}', space=vmem, size = 0x800, scoped, tag = 'input window, operand 1, single buffered']
    #allocation6 [shape = 's32[1]{0}', space=sflag, size = 0x4, scoped, tag = 'scoped memory for tpu_custom_call.1']
    #allocation7 [shape = 'u8[32768]{0}', space=vmem, size = 0x8000, scoped, tag = 'input window, operand 2, single buffered']
    #allocation8 [shape = 'u8[65536]{0}', space=vmem, size = 0x10000, scoped, tag = 'input window, operand 3, single buffered']
    #allocation9 [shape = 's32[1]{0}', space=sflag, size = 0x4, scoped, tag = 'scoped memory for tpu_custom_call.1']
    #allocation10 [shape = 'u8[4096]{0}', space=vmem, size = 0x1000, scoped, tag = 'input window, operand 4, single buffered']
    #allocation11 [shape = 'u8[16384]{0}', space=vmem, size = 0x4000, scoped, tag = 'output window, operand 0, single buffered']
    %10 = vsyncpa [#allocation3], 0
    %11 = vsyncpa [#allocation6], 0
    %12 = vsyncpa [#allocation9], 0
    %13 = vsyncpa [#allocation4], 0
    // Predicated region
    $region2: #{tpu_custom_call.1} parent=1 // pred_check
      _
    $region3: #{tpu_custom_call.1} parent=1 // pred_check_branch
      %15 = sbr.rel (0) target = $region5
    $region4: #{tpu_custom_call.1} parent=1 // pred_region
      %17 = vsyncadd [#allocation3], 0
      %s18 = sshll.u32 %s0, 4
      %s19 = int_to_ptr.hbm [resolvable:$true] %s18
      %s20 = sshll.u32 [#allocation2], 4
      %s21 = int_to_ptr.vmem [resolvable:$true] %s20
      %26 = dma.hbm_to_vmem [thread:$0]  %s19, 256, %s21, [#allocation3], 128, 128, 8
    $region5: #{tpu_custom_call.1} parent=1 // pred_fallthru
      _
    // Predicated region
    $region6: #{tpu_custom_call.1} parent=1 // pred_check
      _
    $region7: #{tpu_custom_call.1} parent=1 // pred_check_branch
      %28 = sbr.rel (0) target = $region9
    $region8: #{tpu_custom_call.1} parent=1 // pred_region
      %30 = vsyncadd [#allocation6], 0
      %s32 = sshll.u32 %s1, 4
      %s33 = int_to_ptr.hbm [resolvable:$true] %s32
      %s34 = sshll.u32 [#allocation5], 4
      %s35 = int_to_ptr.vmem [resolvable:$true] %s34
      %37 = dma.hbm_to_vmem [thread:$0]  %s33, 64, %s35, [#allocation6]
    $region9: #{tpu_custom_call.1} parent=1 // pred_fallthru
      _
    // Predicated region
    $region10: #{tpu_custom_call.1} parent=1 // pred_check
      _
    $region11: #{tpu_custom_call.1} parent=1 // pred_check_branch
      %39 = sbr.rel (0) target = $region13
    $region12: #{tpu_custom_call.1} parent=1 // pred_region
      %41 = vsyncadd [#allocation6], 0
      %s42 = sshll.u32 %s2, 4
      %s43 = int_to_ptr.hbm [resolvable:$true] %s42
      %s44 = sshll.u32 [#allocation7], 4
      %s45 = int_to_ptr.vmem [resolvable:$true] %s44
      %50 = dma.hbm_to_vmem [thread:$0]  %s43, 1024, %s45, [#allocation6], 64, 64, 4
    $region13: #{tpu_custom_call.1} parent=1 // pred_fallthru
      _
    // Predicated region
    $region14: #{tpu_custom_call.1} parent=1 // pred_check
      _
    $region15: #{tpu_custom_call.1} parent=1 // pred_check_branch
      %52 = sbr.rel (0) target = $region17
    $region16: #{tpu_custom_call.1} parent=1 // pred_region
      %54 = vsyncadd [#allocation9], 0
      %s55 = sshll.u32 %s3, 4
      %s56 = int_to_ptr.hbm [resolvable:$true] %s55
      %s57 = sshll.u32 [#allocation8], 4
      %s58 = int_to_ptr.vmem [resolvable:$true] %s57
      %63 = dma.hbm_to_vmem [thread:$0]  %s56, 2048, %s58, [#allocation9], 128, 128, 8
    $region17: #{tpu_custom_call.1} parent=1 // pred_fallthru
      _
    // Predicated region
    $region18: #{tpu_custom_call.1} parent=1 // pred_check
      _
    $region19: #{tpu_custom_call.1} parent=1 // pred_check_branch
      %65 = sbr.rel (0) target = $region21
    $region20: #{tpu_custom_call.1} parent=1 // pred_region
      %67 = vsyncadd [#allocation9], 0
      %s69 = sshll.u32 %s4, 4
      %s70 = int_to_ptr.hbm [resolvable:$true] %s69
      %s71 = sshll.u32 [#allocation10], 4
      %s72 = int_to_ptr.vmem [resolvable:$true] %s71
      %74 = dma.hbm_to_vmem [thread:$0]  %s70, 128, %s72, [#allocation9]
    $region21: #{tpu_custom_call.1} parent=1 // pred_fallthru
      _
    // Predicated region
    $region22: #{tpu_custom_call.1} parent=1 // pred_check
      _
    $region23: #{tpu_custom_call.1} parent=1 // pred_check_branch
      %76 = sbr.rel (0) target = $region25
    $region24: #{tpu_custom_call.1} parent=1 // pred_region
      %78 = dma.done [#allocation3], 256
    $region25: #{tpu_custom_call.1} parent=1 // pred_fallthru
      _
    // Predicated region
    $region26: #{tpu_custom_call.1} parent=1 // pred_check
      _
    $region27: #{tpu_custom_call.1} parent=1 // pred_check_branch
      %80 = sbr.rel (0) target = $region29
    $region28: #{tpu_custom_call.1} parent=1 // pred_region
      %82 = dma.done [#allocation6], 64
    $region29: #{tpu_custom_call.1} parent=1 // pred_fallthru
      _
    // Predicated region
    $region30: #{tpu_custom_call.1} parent=1 // pred_check
      _
    $region31: #{tpu_custom_call.1} parent=1 // pred_check_branch
      %84 = sbr.rel (0) target = $region33
    $region32: #{tpu_custom_call.1} parent=1 // pred_region
      %86 = dma.done [#allocation6], 1024
    $region33: #{tpu_custom_call.1} parent=1 // pred_fallthru
      _
    // Predicated region
    $region34: #{tpu_custom_call.1} parent=1 // pred_check
      _
    $region35: #{tpu_custom_call.1} parent=1 // pred_check_branch
      %88 = sbr.rel (0) target = $region37
    $region36: #{tpu_custom_call.1} parent=1 // pred_region
      %90 = dma.done [#allocation9], 2048
    $region37: #{tpu_custom_call.1} parent=1 // pred_fallthru
      _
    // Predicated region
    $region38: #{tpu_custom_call.1} parent=1 // pred_check
      _
    $region39: #{tpu_custom_call.1} parent=1 // pred_check_branch
      %92 = sbr.rel (0) target = $region41
    $region40: #{tpu_custom_call.1} parent=1 // pred_region
      %94 = dma.done [#allocation9], 128
    $region41: #{tpu_custom_call.1} parent=1 // pred_fallthru
      _
    %v95 = vld [vmem:[#allocation2] sm:$0xff]
    %v96 = vld [vmem:[#allocation2 + $0x8] sm:$0xff]
    %v97 = vld [vmem:[#allocation5] sm:$0x7]
    %v98 = vld [vmem:[#allocation10] sm:$0x77]
    %99 = vadd.xlane.f32.xlu0 %v95
    %v100 = vpop.xlane.xlu0 %99
    %101 = vadd.xlane.f32.xlu0 %v96
    %v102 = vpop.xlane.xlu0 %101
    %v103 = vrcp.pop 128.0
    %v104 = vmul.f32 128.0, %v103
    %v105 = vsub.f32 1.0, %v104
    %v106 = vmul.f32 %v103, %v105
    %v107 = vadd.f32 %v103, %v106
    %vm108 = vweird.f32 %v103
    %v109 = vsel %vm108, %v103, %v107
    %v110 = vmul.f32 %v100, %v109
    %v111 = vmul.f32 %v102, %v109
    %v112 = vsub.f32 %v95, %v110
    %v113 = vsub.f32 %v96, %v111
    %v114 = vmul.f32 %v112, %v112
    %v115 = vmul.f32 %v113, %v113
    %116 = vadd.xlane.f32.xlu0 %v114
    %v117 = vpop.xlane.xlu0 %116
    %118 = vadd.xlane.f32.xlu0 %v115
    %v119 = vpop.xlane.xlu0 %118
    %v120 = vmul.f32 %v117, %v109
    %v121 = vmul.f32 %v119, %v109
    %v122 = vadd.f32 %v120, 1e-05
    %v123 = vadd.f32 %v121, 1e-05
    %v124 = vrsqrt.pop %v122
    %v125 = vmul.f32 %v124, %v122
    %v126 = vmul.f32 %v125, %v124
    %v127 = vmul.f32 0.5, %v126
    %v128 = vsub.f32 1.5, %v127
    %v129 = vmul.f32 %v124, %v128
    %vm130 = vweird.f32 %v122
    %vm131 = vweird.f32 %v124
    %vm132 = vmor %vm130, %vm131
    %v133 = vsel %vm132, %v124, %v129
    %v134 = vrsqrt.pop %v123
    %v135 = vmul.f32 %v134, %v123
    %v136 = vmul.f32 %v135, %v134
    %v137 = vmul.f32 0.5, %v136
    %v138 = vsub.f32 1.5, %v137
    %v139 = vmul.f32 %v134, %v138
    %vm140 = vweird.f32 %v123
    %vm141 = vweird.f32 %v134
    %vm142 = vmor %vm140, %vm141
    %v143 = vsel %vm142, %v134, %v139
    %v144 = vmul.f32 %v112, %v133
    %v145 = vmul.f32 %v113, %v143
    %v146 = vperm.slane %v97, 0
    %v147 = vmul.f32 %v144, %v146
    %v148 = vmul.f32 %v145, %v146
    %v149 = vperm.slane %v97, 1
    %v150 = vadd.f32 %v147, %v149
    %v151 = vadd.f32 %v148, %v149
    %v152 = vpack.c.bf16 %v151, %v150
    %v153 = vld [vmem:[#allocation7] sm:$0xf]
    %v154 = vld [vmem:[#allocation7 + $0x4] sm:$0xf]
    %v155 = vld [vmem:[#allocation7 + $0x8] sm:$0xf]
    %v156 = vld [vmem:[#allocation7 + $0xc] sm:$0xf]
    %v157 = vld [vmem:[#allocation7 + $0x10] sm:$0xf]
    %v158 = vld [vmem:[#allocation7 + $0x14] sm:$0xf]
    %v159 = vld [vmem:[#allocation7 + $0x18] sm:$0xf]
    %v160 = vld [vmem:[#allocation7 + $0x1c] sm:$0xf]
    %v161 = vld [vmem:[#allocation7 + $0x20] sm:$0xf]
    %v162 = vld [vmem:[#allocation7 + $0x24] sm:$0xf]
    %v163 = vld [vmem:[#allocation7 + $0x28] sm:$0xf]
    %v164 = vld [vmem:[#allocation7 + $0x2c] sm:$0xf]
    %v165 = vld [vmem:[#allocation7 + $0x30] sm:$0xf]
    %v166 = vld [vmem:[#allocation7 + $0x34] sm:$0xf]
    %v167 = vld [vmem:[#allocation7 + $0x38] sm:$0xf]
    %v168 = vld [vmem:[#allocation7 + $0x3c] sm:$0xf]
    %v169 = vperm.slane %v97, 2
    %v186 = vunpack.c.l.b16 %v153
    %v187 = vunpack.c.l.b16 %v154
    %v188 = vunpack.c.l.b16 %v155
    %v189 = vunpack.c.l.b16 %v156
    %v190 = vunpack.c.l.b16 %v157
    %v191 = vunpack.c.l.b16 %v158
    %v192 = vunpack.c.l.b16 %v159
    %v193 = vunpack.c.l.b16 %v160
    %v194 = vunpack.c.l.b16 %v161
    %v195 = vunpack.c.l.b16 %v162
    %v196 = vunpack.c.l.b16 %v163
    %v197 = vunpack.c.l.b16 %v164
    %v198 = vunpack.c.l.b16 %v165
    %v199 = vunpack.c.l.b16 %v166
    %v200 = vunpack.c.l.b16 %v167
    %v201 = vunpack.c.l.b16 %v168
    %v202 = vpack.c.b16 %v187, %v186
    %v203 = vpack.c.b16 %v189, %v188
    %v204 = vpack.c.b16 %v191, %v190
    %v205 = vpack.c.b16 %v193, %v192
    %v206 = vpack.c.b16 %v195, %v194
    %v207 = vpack.c.b16 %v197, %v196
    %v208 = vpack.c.b16 %v199, %v198
    %v209 = vpack.c.b16 %v201, %v200
    %218 = vmatpush.bf16.msra.mxu0 %v209
    %219 = vmatpush.bf16.msra.mxu0 %v208
    %220 = vmatpush.bf16.msra.mxu0 %v207
    %221 = vmatpush.bf16.msra.mxu0 %v206
    %222 = vmatpush.bf16.msra.mxu0 %v205
    %223 = vmatpush.bf16.msra.mxu0 %v204
    %224 = vmatpush.bf16.msra.mxu0 %v203
    %225 = vmatpush.bf16.msra.mxu0 %v202
    %226 = vmatmul.bf16.gmra.mxu0 %v152
    %v227 = vpop.f32.mrf.mxu0
    %v228 = vadd.f32 %v169, %v227
    %v229 = vpop.f32.mrf.mxu0
    %v230 = vadd.f32 %v169, %v229
    %231 = vdwg.mxu0
    %v232 = vmul.f32 %v228, 0.5
    %v233 = vmul.f32 %v230, 0.5
    %v234 = vmul.f32 %v228, 0.70710677
    %v235 = vmul.f32 %v230, 0.70710677
    %v236 = vmul.f32 %v234, %v234
    %v237 = vmin.f32 16.0, %v236
    %v238 = vmul.f32 %v237, 2.1237322e-06
    %v239 = vadd.f32 %v238, 0.00028619796
    %v240 = vmul.f32 %v237, %v239
    %v241 = vadd.f32 %v240, 0.0036580483
    %v242 = vmul.f32 %v237, %v241
    %v243 = vadd.f32 %v242, 0.05243302
    %v244 = vmul.f32 %v237, %v243
    %v245 = vadd.f32 %v244, 0.18741608
    %v246 = vmul.f32 %v237, %v245
    %v247 = vadd.f32 %v246, 1.1283791
    %v248 = vmul.f32 %v234, %v247
    %v249 = vmul.f32 %v237, 3.8918573e-05
    %v250 = vadd.f32 %v249, 0.001143296
    %v251 = vmul.f32 %v237, %v250
    %v252 = vadd.f32 %v251, 0.014752088
    %v253 = vmul.f32 %v237, %v252
    %v254 = vadd.f32 %v253, 0.112945676
    %v255 = vmul.f32 %v237, %v254
    %v256 = vadd.f32 %v255, 0.4994258
    %v257 = vmul.f32 %v237, %v256
    %v258 = vadd.f32 %v257, 1.0
    %v259 = vrcp.pop %v258
    %v260 = vmul.f32 %v258, %v259
    %v261 = vsub.f32 1.0, %v260
    %v262 = vmul.f32 %v259, %v261
    %v263 = vadd.f32 %v259, %v262
    %vm264 = vweird.f32 %v258
    %vm265 = vweird.f32 %v259
    %vm266 = vmor %vm264, %vm265
    %v267 = vsel %vm266, %v259, %v263
    %v268 = vand.u32 2147483647, %v258
    %vm269 = vcmp.eq.f32.partialorder %v268, 8.507059e+37
    %v270 = vand.u32 %v258, 2147483648
    %v271 = vor.u32 1.1754944e-38, %v270
    %v272 = vsel %vm269, %v271, %v267
    %v273 = vmul.f32 %v248, %v272
    %v274 = vmin.f32 %v273, 1.0
    %v275 = vmax.f32 %v274, -1.0
    %v276 = vmul.f32 %v235, %v235
    %v277 = vmin.f32 16.0, %v276
    %v278 = vmul.f32 %v277, 2.1237322e-06
    %v279 = vadd.f32 %v278, 0.00028619796
    %v280 = vmul.f32 %v277, %v279
    %v281 = vadd.f32 %v280, 0.0036580483
    %v282 = vmul.f32 %v277, %v281
    %v283 = vadd.f32 %v282, 0.05243302
    %v284 = vmul.f32 %v277, %v283
    %v285 = vadd.f32 %v284, 0.18741608
    %v286 = vmul.f32 %v277, %v285
    %v287 = vadd.f32 %v286, 1.1283791
    %v288 = vmul.f32 %v235, %v287
    %v289 = vmul.f32 %v277, 3.8918573e-05
    %v290 = vadd.f32 %v289, 0.001143296
    %v291 = vmul.f32 %v277, %v290
    %v292 = vadd.f32 %v291, 0.014752088
    %v293 = vmul.f32 %v277, %v292
    %v294 = vadd.f32 %v293, 0.112945676
    %v295 = vmul.f32 %v277, %v294
    %v296 = vadd.f32 %v295, 0.4994258
    %v297 = vmul.f32 %v277, %v296
    %v298 = vadd.f32 %v297, 1.0
    %v299 = vrcp.pop %v298
    %v300 = vmul.f32 %v298, %v299
    %v301 = vsub.f32 1.0, %v300
    %v302 = vmul.f32 %v299, %v301
    %v303 = vadd.f32 %v299, %v302
    %vm304 = vweird.f32 %v298
    %vm305 = vweird.f32 %v299
    %vm306 = vmor %vm304, %vm305
    %v307 = vsel %vm306, %v299, %v303
    %v308 = vand.u32 2147483647, %v298
    %vm309 = vcmp.eq.f32.partialorder %v308, 8.507059e+37
    %v310 = vand.u32 %v298, 2147483648
    %v311 = vor.u32 1.1754944e-38, %v310
    %v312 = vsel %vm309, %v311, %v307
    %v313 = vmul.f32 %v288, %v312
    %v314 = vmin.f32 %v313, 1.0
    %v315 = vmax.f32 %v314, -1.0
    %v316 = vadd.f32 %v275, 1.0
    %v317 = vadd.f32 %v315, 1.0
    %v318 = vmul.f32 %v232, %v316
    %v319 = vmul.f32 %v233, %v317
    %v320 = vpack.c.bf16 %v319, %v318
    %v321 = vld [vmem:[#allocation8] sm:$0xff]
    %v322 = vld [vmem:[#allocation8 + $0x8] sm:$0xff]
    %v323 = vld [vmem:[#allocation8 + $0x10] sm:$0xff]
    %v324 = vld [vmem:[#allocation8 + $0x18] sm:$0xff]
    %v325 = vld [vmem:[#allocation8 + $0x20] sm:$0xff]
    %v326 = vld [vmem:[#allocation8 + $0x28] sm:$0xff]
    %v327 = vld [vmem:[#allocation8 + $0x30] sm:$0xff]
    %v328 = vld [vmem:[#allocation8 + $0x38] sm:$0xff]
    %v329 = vld [vmem:[#allocation8 + $0x40] sm:$0xff]
    %v330 = vld [vmem:[#allocation8 + $0x48] sm:$0xff]
    %v331 = vld [vmem:[#allocation8 + $0x50] sm:$0xff]
    %v332 = vld [vmem:[#allocation8 + $0x58] sm:$0xff]
    %v333 = vld [vmem:[#allocation8 + $0x60] sm:$0xff]
    %v334 = vld [vmem:[#allocation8 + $0x68] sm:$0xff]
    %v335 = vld [vmem:[#allocation8 + $0x70] sm:$0xff]
    %v336 = vld [vmem:[#allocation8 + $0x78] sm:$0xff]
    %v338 = vperm.slane %v98, 0
    %v339 = vperm.slane %v98, 4
    %v342 = vperm.slane %v338, 0
    %v343 = vperm.slane %v339, 0
    %v360 = vunpack.c.l.b16 %v321
    %v361 = vunpack.c.h.b16 %v321
    %v362 = vunpack.c.l.b16 %v322
    %v363 = vunpack.c.h.b16 %v322
    %v364 = vunpack.c.l.b16 %v323
    %v365 = vunpack.c.h.b16 %v323
    %v366 = vunpack.c.l.b16 %v324
    %v367 = vunpack.c.h.b16 %v324
    %v368 = vunpack.c.l.b16 %v325
    %v369 = vunpack.c.h.b16 %v325
    %v370 = vunpack.c.l.b16 %v326
    %v371 = vunpack.c.h.b16 %v326
    %v372 = vunpack.c.l.b16 %v327
    %v373 = vunpack.c.h.b16 %v327
    %v374 = vunpack.c.l.b16 %v328
    %v375 = vunpack.c.h.b16 %v328
    %v376 = vunpack.c.l.b16 %v329
    %v377 = vunpack.c.h.b16 %v329
    %v378 = vunpack.c.l.b16 %v330
    %v379 = vunpack.c.h.b16 %v330
    %v380 = vunpack.c.l.b16 %v331
    %v381 = vunpack.c.h.b16 %v331
    %v382 = vunpack.c.l.b16 %v332
    %v383 = vunpack.c.h.b16 %v332
    %v384 = vunpack.c.l.b16 %v333
    %v385 = vunpack.c.h.b16 %v333
    %v386 = vunpack.c.l.b16 %v334
    %v387 = vunpack.c.h.b16 %v334
    %v388 = vunpack.c.l.b16 %v335
    %v389 = vunpack.c.h.b16 %v335
    %v390 = vunpack.c.l.b16 %v336
    %v391 = vunpack.c.h.b16 %v336
    %v392 = vpack.c.b16 %v362, %v360
    %v393 = vpack.c.b16 %v363, %v361
    %v394 = vpack.c.b16 %v366, %v364
    %v395 = vpack.c.b16 %v367, %v365
    %v396 = vpack.c.b16 %v370, %v368
    %v397 = vpack.c.b16 %v371, %v369
    %v398 = vpack.c.b16 %v374, %v372
    %v399 = vpack.c.b16 %v375, %v373
    %v400 = vpack.c.b16 %v378, %v376
    %v401 = vpack.c.b16 %v379, %v377
    %v402 = vpack.c.b16 %v382, %v380
    %v403 = vpack.c.b16 %v383, %v381
    %v404 = vpack.c.b16 %v386, %v384
    %v405 = vpack.c.b16 %v387, %v385
    %v406 = vpack.c.b16 %v390, %v388
    %v407 = vpack.c.b16 %v391, %v389
    %424 = vmatpush.bf16.msra.mxu0 %v406
    %425 = vmatpush.bf16.msra.mxu0 %v404
    %426 = vmatpush.bf16.msra.mxu0 %v402
    %427 = vmatpush.bf16.msra.mxu0 %v400
    %428 = vmatpush.bf16.msra.mxu0 %v398
    %429 = vmatpush.bf16.msra.mxu0 %v396
    %430 = vmatpush.bf16.msra.mxu0 %v394
    %431 = vmatpush.bf16.msra.mxu0 %v392
    %432 = vmatmul.bf16.gmra.mxu0 %v320
    %v433 = vpop.f32.mrf.mxu0
    %v434 = vadd.f32 %v342, %v433
    %v435 = vpop.f32.mrf.mxu0
    %v436 = vadd.f32 %v342, %v435
    %437 = vdwg.mxu0
    %438 = vmatpush.bf16.msra.mxu0 %v407
    %439 = vmatpush.bf16.msra.mxu0 %v405
    %440 = vmatpush.bf16.msra.mxu0 %v403
    %441 = vmatpush.bf16.msra.mxu0 %v401
    %442 = vmatpush.bf16.msra.mxu0 %v399
    %443 = vmatpush.bf16.msra.mxu0 %v397
    %444 = vmatpush.bf16.msra.mxu0 %v395
    %445 = vmatpush.bf16.msra.mxu0 %v393
    %446 = vmatmul.bf16.gmra.mxu0 %v320
    %v447 = vpop.f32.mrf.mxu0
    %v448 = vadd.f32 %v343, %v447
    %v449 = vpop.f32.mrf.mxu0
    %v450 = vadd.f32 %v343, %v449
    %451 = vdwg.mxu0
    %v452 = vadd.f32 %v434, %v448
    %453 = vadd.xlane.f32.xlu0 %v452
    %v454 = vpop.xlane.xlu0 %453
    %v455 = vadd.f32 %v436, %v450
    %456 = vadd.xlane.f32.xlu0 %v455
    %v457 = vpop.xlane.xlu0 %456
    %v458 = vrcp.pop 256.0
    %v459 = vmul.f32 256.0, %v458
    %v460 = vsub.f32 1.0, %v459
    %v461 = vmul.f32 %v458, %v460
    %v462 = vadd.f32 %v458, %v461
    %vm463 = vweird.f32 %v458
    %v464 = vsel %vm463, %v458, %v462
    %v465 = vmul.f32 %v454, %v464
    %v466 = vmul.f32 %v457, %v464
    %v467 = vsub.f32 %v434, %v465
    %v468 = vsub.f32 %v448, %v465
    %v469 = vsub.f32 %v436, %v466
    %v470 = vsub.f32 %v450, %v466
    %v471 = vmul.f32 %v467, %v467
    %v472 = vmul.f32 %v468, %v468
    %v473 = vmul.f32 %v469, %v469
    %v474 = vmul.f32 %v470, %v470
    %v475 = vadd.f32 %v471, %v472
    %476 = vadd.xlane.f32.xlu0 %v475
    %v477 = vpop.xlane.xlu0 %476
    %v478 = vadd.f32 %v473, %v474
    %479 = vadd.xlane.f32.xlu0 %v478
    %v480 = vpop.xlane.xlu0 %479
    %v481 = vmul.f32 %v477, %v464
    %v482 = vmul.f32 %v480, %v464
    %v483 = vadd.f32 %v481, 1e-05
    %v484 = vadd.f32 %v482, 1e-05
    %v485 = vrsqrt.pop %v483
    %v486 = vmul.f32 %v485, %v483
    %v487 = vmul.f32 %v486, %v485
    %v488 = vmul.f32 0.5, %v487
    %v489 = vsub.f32 1.5, %v488
    %v490 = vmul.f32 %v485, %v489
    %vm491 = vweird.f32 %v483
    %vm492 = vweird.f32 %v485
    %vm493 = vmor %vm491, %vm492
    %v494 = vsel %vm493, %v485, %v490
    %v495 = vrsqrt.pop %v484
    %v496 = vmul.f32 %v495, %v484
    %v497 = vmul.f32 %v496, %v495
    %v498 = vmul.f32 0.5, %v497
    %v499 = vsub.f32 1.5, %v498
    %v500 = vmul.f32 %v495, %v499
    %vm501 = vweird.f32 %v484
    %vm502 = vweird.f32 %v495
    %vm503 = vmor %vm501, %vm502
    %v504 = vsel %vm503, %v495, %v500
    %v505 = vmul.f32 %v467, %v494
    %v506 = vmul.f32 %v468, %v494
    %v507 = vmul.f32 %v469, %v504
    %v508 = vmul.f32 %v470, %v504
    %v509 = vperm.slane %v98, 1
    %v510 = vperm.slane %v98, 5
    %v513 = vperm.slane %v509, 1
    %v514 = vperm.slane %v510, 1
    %v515 = vmul.f32 %v505, %v513
    %v516 = vmul.f32 %v506, %v514
    %v517 = vmul.f32 %v507, %v513
    %v518 = vmul.f32 %v508, %v514
    %v519 = vperm.slane %v98, 2
    %v520 = vperm.slane %v98, 6
    %v523 = vperm.slane %v519, 2
    %v524 = vperm.slane %v520, 2
    %v525 = vadd.f32 %v515, %v523
    %v526 = vadd.f32 %v516, %v524
    %v527 = vadd.f32 %v517, %v523
    %v528 = vadd.f32 %v518, %v524
    %529 = vst [vmem:[#allocation11] sm:$0xff] %v525
    %530 = vst [vmem:[#allocation11 + $0x8] sm:$0xff] %v526
    %531 = vst [vmem:[#allocation11 + $0x10] sm:$0xff] %v527
    %532 = vst [vmem:[#allocation11 + $0x18] sm:$0xff] %v528
    // Predicated region
    $region42: #{tpu_custom_call.1} parent=1 // pred_check
      _
    $region43: #{tpu_custom_call.1} parent=1 // pred_check_branch
      %534 = sbr.rel (0) target = $region45
    $region44: #{tpu_custom_call.1} parent=1 // pred_region
      %536 = vsyncadd [#allocation4], 0
      %s537 = sshll.u32 [#allocation11], 4
      %s538 = int_to_ptr.vmem [resolvable:$true] %s537
      %s539 = sshll.u32 %s5, 4
      %s540 = int_to_ptr.hbm [resolvable:$true] %s539
      %545 = dma.vmem_to_hbm [thread:$0]  %s538, 512, %s540, [#allocation4], 256, 256, 16
    $region45: #{tpu_custom_call.1} parent=1 // pred_fallthru
      _
    // Predicated region
    $region46: #{tpu_custom_call.1} parent=1 // pred_check
      _
    $region47: #{tpu_custom_call.1} parent=1 // pred_check_branch
      %547 = sbr.rel (0) target = $region49
    $region48: #{tpu_custom_call.1} parent=1 // pred_region
      %549 = dma.done [#allocation4], 512
    $region49: #{tpu_custom_call.1} parent=1 // pred_fallthru
      _
    %550 = vsyncpa [#allocation3], 1
    %551 = vsyncpa [#allocation6], 1
    %552 = vsyncpa [#allocation9], 1
    %553 = vsyncpa [#allocation4], 1

// kernel: tpu_custom_call.1
$region0: #{tpu_custom_call.1}
  #allocation0 [shape = 'u32[]', space=smem, size = 0x4, offset = 0x4, fixed_abs, tag = 'smem constant byte address 0x4 - core index']
  #allocation1 [shape = 'u32[72,128]{1,0:T(1,128)}', space=vmem, size = 0x9000, scoped, tag = 'internal scratch']
  %s0 = inlined_call_operand.hbm [shape: f32[16,128], index: 0, kind: input, shape index: {}]
  %s1 = inlined_call_operand.hbm [shape: f32[3,128], index: 1, kind: input, shape index: {}]
  %s2 = inlined_call_operand.hbm [shape: bf16[128,128], index: 2, kind: input, shape index: {}]
  %s3 = inlined_call_operand.hbm [shape: bf16[128,256], index: 3, kind: input, shape index: {}]
  %s4 = inlined_call_operand.hbm [shape: f32[3,256], index: 4, kind: input, shape index: {}]
  %s5 = inlined_call_operand.hbm [shape: f32[16,256], index: 5, kind: output, shape index: {}]
  %s6 = sld [smem:[#allocation0]]
  $region50: #{tpu_custom_call.1} parent=0
    _
  %s8 = ssub.s32 1, %s6
  %s9 = scalar_select 0, %s8, %s6
  $region1: #{tpu_custom_call.1} parent=0
    #allocation2 [shape = 'u8[8192]{0}', space=vmem, size = 0x2000, scoped, tag = 'input window, operand 0, single buffered']
    #allocation3 [shape = 's32[1]{0}', space=sflag, size = 0x4, scoped, tag = 'scoped memory for tpu_custom_call.1']
    #allocation4 [shape = 's32[1]{0}', space=sflag, size = 0x4, scoped, tag = 'scoped memory for tpu_custom_call.1']
    #allocation5 [shape = 'u8[2048]{0}', space=vmem, size = 0x800, scoped, tag = 'input window, operand 1, single buffered']
    #allocation6 [shape = 's32[1]{0}', space=sflag, size = 0x4, scoped, tag = 'scoped memory for tpu_custom_call.1']
    #allocation7 [shape = 'u8[32768]{0}', space=vmem, size = 0x8000, scoped, tag = 'input window, operand 2, single buffered']
    #allocation8 [shape = 'u8[65536]{0}', space=vmem, size = 0x10000, scoped, tag = 'input window, operand 3, single buffered']
    #allocation9 [shape = 's32[1]{0}', space=sflag, size = 0x4, scoped, tag = 'scoped memory for tpu_custom_call.1']
    #allocation10 [shape = 'u8[4096]{0}', space=vmem, size = 0x1000, scoped, tag = 'input window, operand 4, single buffered']
    #allocation11 [shape = 'u8[16384]{0}', space=vmem, size = 0x4000, scoped, tag = 'output window, operand 0, single buffered']
    %10 = vsyncpa [#allocation3], 0
    %11 = vsyncpa [#allocation6], 0
    %12 = vsyncpa [#allocation9], 0
    %13 = vsyncpa [#allocation4], 0
    // Predicated region
    $region2: #{tpu_custom_call.1} parent=1 // pred_check
      _
    $region3: #{tpu_custom_call.1} parent=1 // pred_check_branch
      %15 = sbr.rel (0) target = $region5
    $region4: #{tpu_custom_call.1} parent=1 // pred_region
      %17 = vsyncadd [#allocation3], 0
      %s18 = sshll.u32 %s0, 4
      %s19 = int_to_ptr.hbm [resolvable:$true] %s18
      %s20 = sshll.u32 [#allocation2], 4
      %s21 = int_to_ptr.vmem [resolvable:$true] %s20
      %26 = dma.hbm_to_vmem [thread:$0]  %s19, 256, %s21, [#allocation3], 128, 128, 8
    $region5: #{tpu_custom_call.1} parent=1 // pred_fallthru
      _
    // Predicated region
    $region6: #{tpu_custom_call.1} parent=1 // pred_check
      _
    $region7: #{tpu_custom_call.1} parent=1 // pred_check_branch
      %28 = sbr.rel (0) target = $region9
    $region8: #{tpu_custom_call.1} parent=1 // pred_region
      %30 = vsyncadd [#allocation6], 0
      %s32 = sshll.u32 %s1, 4
      %s33 = int_to_ptr.hbm [resolvable:$true] %s32
      %s34 = sshll.u32 [#allocation5], 4
      %s35 = int_to_ptr.vmem [resolvable:$true] %s34
      %37 = dma.hbm_to_vmem [thread:$0]  %s33, 64, %s35, [#allocation6]
    $region9: #{tpu_custom_call.1} parent=1 // pred_fallthru
      _
    // Predicated region
    $region10: #{tpu_custom_call.1} parent=1 // pred_check
      _
    $region11: #{tpu_custom_call.1} parent=1 // pred_check_branch
      %39 = sbr.rel (0) target = $region13
    $region12: #{tpu_custom_call.1} parent=1 // pred_region
      %41 = vsyncadd [#allocation6], 0
      %s42 = sshll.u32 %s2, 4
      %s43 = int_to_ptr.hbm [resolvable:$true] %s42
      %s44 = sshll.u32 [#allocation7], 4
      %s45 = int_to_ptr.vmem [resolvable:$true] %s44
      %50 = dma.hbm_to_vmem [thread:$0]  %s43, 1024, %s45, [#allocation6], 64, 64, 4
    $region13: #{tpu_custom_call.1} parent=1 // pred_fallthru
      _
    // Predicated region
    $region14: #{tpu_custom_call.1} parent=1 // pred_check
      _
    $region15: #{tpu_custom_call.1} parent=1 // pred_check_branch
      %52 = sbr.rel (0) target = $region17
    $region16: #{tpu_custom_call.1} parent=1 // pred_region
      %54 = vsyncadd [#allocation9], 0
      %s55 = sshll.u32 %s3, 4
      %s56 = int_to_ptr.hbm [resolvable:$true] %s55
      %s57 = sshll.u32 [#allocation8], 4
      %s58 = int_to_ptr.vmem [resolvable:$true] %s57
      %63 = dma.hbm_to_vmem [thread:$0]  %s56, 2048, %s58, [#allocation9], 128, 128, 8
    $region17: #{tpu_custom_call.1} parent=1 // pred_fallthru
      _
    // Predicated region
    $region18: #{tpu_custom_call.1} parent=1 // pred_check
      _
    $region19: #{tpu_custom_call.1} parent=1 // pred_check_branch
      %65 = sbr.rel (0) target = $region21
    $region20: #{tpu_custom_call.1} parent=1 // pred_region
      %67 = vsyncadd [#allocation9], 0
      %s69 = sshll.u32 %s4, 4
      %s70 = int_to_ptr.hbm [resolvable:$true] %s69
      %s71 = sshll.u32 [#allocation10], 4
      %s72 = int_to_ptr.vmem [resolvable:$true] %s71
      %74 = dma.hbm_to_vmem [thread:$0]  %s70, 128, %s72, [#allocation9]
    $region21: #{tpu_custom_call.1} parent=1 // pred_fallthru
      _
    // Predicated region
    $region22: #{tpu_custom_call.1} parent=1 // pred_check
      _
    $region23: #{tpu_custom_call.1} parent=1 // pred_check_branch
      %76 = sbr.rel (0) target = $region25
    $region24: #{tpu_custom_call.1} parent=1 // pred_region
      %78 = dma.done [#allocation3], 256
    $region25: #{tpu_custom_call.1} parent=1 // pred_fallthru
      _
    // Predicated region
    $region26: #{tpu_custom_call.1} parent=1 // pred_check
      _
    $region27: #{tpu_custom_call.1} parent=1 // pred_check_branch
      %80 = sbr.rel (0) target = $region29
    $region28: #{tpu_custom_call.1} parent=1 // pred_region
      %82 = dma.done [#allocation6], 64
    $region29: #{tpu_custom_call.1} parent=1 // pred_fallthru
      _
    // Predicated region
    $region30: #{tpu_custom_call.1} parent=1 // pred_check
      _
    $region31: #{tpu_custom_call.1} parent=1 // pred_check_branch
      %84 = sbr.rel (0) target = $region33
    $region32: #{tpu_custom_call.1} parent=1 // pred_region
      %86 = dma.done [#allocation6], 1024
    $region33: #{tpu_custom_call.1} parent=1 // pred_fallthru
      _
    // Predicated region
    $region34: #{tpu_custom_call.1} parent=1 // pred_check
      _
    $region35: #{tpu_custom_call.1} parent=1 // pred_check_branch
      %88 = sbr.rel (0) target = $region37
    $region36: #{tpu_custom_call.1} parent=1 // pred_region
      %90 = dma.done [#allocation9], 2048
    $region37: #{tpu_custom_call.1} parent=1 // pred_fallthru
      _
    // Predicated region
    $region38: #{tpu_custom_call.1} parent=1 // pred_check
      _
    $region39: #{tpu_custom_call.1} parent=1 // pred_check_branch
      %92 = sbr.rel (0) target = $region41
    $region40: #{tpu_custom_call.1} parent=1 // pred_region
      %94 = dma.done [#allocation9], 128
    $region41: #{tpu_custom_call.1} parent=1 // pred_fallthru
      _
    %v95 = vld [vmem:[#allocation2] sm:$0xff]
    %v96 = vld [vmem:[#allocation2 + $0x8] sm:$0xff]
    %v97 = vld [vmem:[#allocation5] sm:$0x7]
    %v98 = vld [vmem:[#allocation10] sm:$0x77]
    %99 = vadd.xlane.f32.xlu0 %v95
    %v100 = vpop.xlane.xlu0 %99
    %101 = vadd.xlane.f32.xlu0 %v96
    %v102 = vpop.xlane.xlu0 %101
    %v103 = vrcp.pop 128.0
    %v104 = vmul.f32 128.0, %v103
    %v105 = vsub.f32 1.0, %v104
    %v106 = vmul.f32 %v103, %v105
    %v107 = vadd.f32 %v103, %v106
    %vm108 = vweird.f32 %v103
    %v109 = vsel %vm108, %v103, %v107
    %v110 = vmul.f32 %v100, %v109
    %v111 = vmul.f32 %v102, %v109
    %v112 = vsub.f32 %v95, %v110
    %v113 = vsub.f32 %v96, %v111
    %v114 = vmul.f32 %v112, %v112
    %v115 = vmul.f32 %v113, %v113
    %116 = vadd.xlane.f32.xlu0 %v114
    %v117 = vpop.xlane.xlu0 %116
    %118 = vadd.xlane.f32.xlu0 %v115
    %v119 = vpop.xlane.xlu0 %118
    %v120 = vmul.f32 %v117, %v109
    %v121 = vmul.f32 %v119, %v109
    %v122 = vadd.f32 %v120, 1e-05
    %v123 = vadd.f32 %v121, 1e-05
    %v124 = vrsqrt.pop %v122
    %v125 = vmul.f32 %v124, %v122
    %v126 = vmul.f32 %v125, %v124
    %v127 = vmul.f32 0.5, %v126
    %v128 = vsub.f32 1.5, %v127
    %v129 = vmul.f32 %v124, %v128
    %vm130 = vweird.f32 %v122
    %vm131 = vweird.f32 %v124
    %vm132 = vmor %vm130, %vm131
    %v133 = vsel %vm132, %v124, %v129
    %v134 = vrsqrt.pop %v123
    %v135 = vmul.f32 %v134, %v123
    %v136 = vmul.f32 %v135, %v134
    %v137 = vmul.f32 0.5, %v136
    %v138 = vsub.f32 1.5, %v137
    %v139 = vmul.f32 %v134, %v138
    %vm140 = vweird.f32 %v123
    %vm141 = vweird.f32 %v134
    %vm142 = vmor %vm140, %vm141
    %v143 = vsel %vm142, %v134, %v139
    %v144 = vmul.f32 %v112, %v133
    %v145 = vmul.f32 %v113, %v143
    %v146 = vperm.slane %v97, 0
    %v147 = vmul.f32 %v144, %v146
    %v148 = vmul.f32 %v145, %v146
    %v149 = vperm.slane %v97, 1
    %v150 = vadd.f32 %v147, %v149
    %v151 = vadd.f32 %v148, %v149
    %v152 = vpack.c.bf16 %v151, %v150
    %v153 = vld [vmem:[#allocation7] sm:$0xf]
    %v154 = vld [vmem:[#allocation7 + $0x4] sm:$0xf]
    %v155 = vld [vmem:[#allocation7 + $0x8] sm:$0xf]
    %v156 = vld [vmem:[#allocation7 + $0xc] sm:$0xf]
    %v157 = vld [vmem:[#allocation7 + $0x10] sm:$0xf]
    %v158 = vld [vmem:[#allocation7 + $0x14] sm:$0xf]
    %v159 = vld [vmem:[#allocation7 + $0x18] sm:$0xf]
    %v160 = vld [vmem:[#allocation7 + $0x1c] sm:$0xf]
    %v161 = vld [vmem:[#allocation7 + $0x20] sm:$0xf]
    %v162 = vld [vmem:[#allocation7 + $0x24] sm:$0xf]
    %v163 = vld [vmem:[#allocation7 + $0x28] sm:$0xf]
    %v164 = vld [vmem:[#allocation7 + $0x2c] sm:$0xf]
    %v165 = vld [vmem:[#allocation7 + $0x30] sm:$0xf]
    %v166 = vld [vmem:[#allocation7 + $0x34] sm:$0xf]
    %v167 = vld [vmem:[#allocation7 + $0x38] sm:$0xf]
    %v168 = vld [vmem:[#allocation7 + $0x3c] sm:$0xf]
    %v169 = vperm.slane %v97, 2
    %v186 = vunpack.c.l.b16 %v153
    %v187 = vunpack.c.l.b16 %v154
    %v188 = vunpack.c.l.b16 %v155
    %v189 = vunpack.c.l.b16 %v156
    %v190 = vunpack.c.l.b16 %v157
    %v191 = vunpack.c.l.b16 %v158
    %v192 = vunpack.c.l.b16 %v159
    %v193 = vunpack.c.l.b16 %v160
    %v194 = vunpack.c.l.b16 %v161
    %v195 = vunpack.c.l.b16 %v162
    %v196 = vunpack.c.l.b16 %v163
    %v197 = vunpack.c.l.b16 %v164
    %v198 = vunpack.c.l.b16 %v165
    %v199 = vunpack.c.l.b16 %v166
    %v200 = vunpack.c.l.b16 %v167
    %v201 = vunpack.c.l.b16 %v168
    %v202 = vpack.c.b16 %v187, %v186
    %v203 = vpack.c.b16 %v189, %v188
    %v204 = vpack.c.b16 %v191, %v190
    %v205 = vpack.c.b16 %v193, %v192
    %v206 = vpack.c.b16 %v195, %v194
    %v207 = vpack.c.b16 %v197, %v196
    %v208 = vpack.c.b16 %v199, %v198
    %v209 = vpack.c.b16 %v201, %v200
    %218 = vmatpush.bf16.msra.mxu0 %v209
    %219 = vmatpush.bf16.msra.mxu0 %v208
    %220 = vmatpush.bf16.msra.mxu0 %v207
    %221 = vmatpush.bf16.msra.mxu0 %v206
    %222 = vmatpush.bf16.msra.mxu0 %v205
    %223 = vmatpush.bf16.msra.mxu0 %v204
    %224 = vmatpush.bf16.msra.mxu0 %v203
    %225 = vmatpush.bf16.msra.mxu0 %v202
    %226 = vmatmul.bf16.gmra.mxu0 %v152
    %v227 = vpop.f32.mrf.mxu0
    %v228 = vadd.f32 %v169, %v227
    %v229 = vpop.f32.mrf.mxu0
    %v230 = vadd.f32 %v169, %v229
    %231 = vdwg.mxu0
    %v232 = vmul.f32 %v228, 0.5
    %v233 = vmul.f32 %v230, 0.5
    %v234 = vmul.f32 %v228, 0.70710677
    %v235 = vmul.f32 %v230, 0.70710677
    %v236 = vmul.f32 %v234, %v234
    %v237 = vmin.f32 16.0, %v236
    %v238 = vmul.f32 %v237, 2.1237322e-06
    %v239 = vadd.f32 %v238, 0.00028619796
    %v240 = vmul.f32 %v237, %v239
    %v241 = vadd.f32 %v240, 0.0036580483
    %v242 = vmul.f32 %v237, %v241
    %v243 = vadd.f32 %v242, 0.05243302
    %v244 = vmul.f32 %v237, %v243
    %v245 = vadd.f32 %v244, 0.18741608
    %v246 = vmul.f32 %v237, %v245
    %v247 = vadd.f32 %v246, 1.1283791
    %v248 = vmul.f32 %v234, %v247
    %v249 = vmul.f32 %v237, 3.8918573e-05
    %v250 = vadd.f32 %v249, 0.001143296
    %v251 = vmul.f32 %v237, %v250
    %v252 = vadd.f32 %v251, 0.014752088
    %v253 = vmul.f32 %v237, %v252
    %v254 = vadd.f32 %v253, 0.112945676
    %v255 = vmul.f32 %v237, %v254
    %v256 = vadd.f32 %v255, 0.4994258
    %v257 = vmul.f32 %v237, %v256
    %v258 = vadd.f32 %v257, 1.0
    %v259 = vrcp.pop %v258
    %v260 = vmul.f32 %v258, %v259
    %v261 = vsub.f32 1.0, %v260
    %v262 = vmul.f32 %v259, %v261
    %v263 = vadd.f32 %v259, %v262
    %vm264 = vweird.f32 %v258
    %vm265 = vweird.f32 %v259
    %vm266 = vmor %vm264, %vm265
    %v267 = vsel %vm266, %v259, %v263
    %v268 = vand.u32 2147483647, %v258
    %vm269 = vcmp.eq.f32.partialorder %v268, 8.507059e+37
    %v270 = vand.u32 %v258, 2147483648
    %v271 = vor.u32 1.1754944e-38, %v270
    %v272 = vsel %vm269, %v271, %v267
    %v273 = vmul.f32 %v248, %v272
    %v274 = vmin.f32 %v273, 1.0
    %v275 = vmax.f32 %v274, -1.0
    %v276 = vmul.f32 %v235, %v235
    %v277 = vmin.f32 16.0, %v276
    %v278 = vmul.f32 %v277, 2.1237322e-06
    %v279 = vadd.f32 %v278, 0.00028619796
    %v280 = vmul.f32 %v277, %v279
    %v281 = vadd.f32 %v280, 0.0036580483
    %v282 = vmul.f32 %v277, %v281
    %v283 = vadd.f32 %v282, 0.05243302
    %v284 = vmul.f32 %v277, %v283
    %v285 = vadd.f32 %v284, 0.18741608
    %v286 = vmul.f32 %v277, %v285
    %v287 = vadd.f32 %v286, 1.1283791
    %v288 = vmul.f32 %v235, %v287
    %v289 = vmul.f32 %v277, 3.8918573e-05
    %v290 = vadd.f32 %v289, 0.001143296
    %v291 = vmul.f32 %v277, %v290
    %v292 = vadd.f32 %v291, 0.014752088
    %v293 = vmul.f32 %v277, %v292
    %v294 = vadd.f32 %v293, 0.112945676
    %v295 = vmul.f32 %v277, %v294
    %v296 = vadd.f32 %v295, 0.4994258
    %v297 = vmul.f32 %v277, %v296
    %v298 = vadd.f32 %v297, 1.0
    %v299 = vrcp.pop %v298
    %v300 = vmul.f32 %v298, %v299
    %v301 = vsub.f32 1.0, %v300
    %v302 = vmul.f32 %v299, %v301
    %v303 = vadd.f32 %v299, %v302
    %vm304 = vweird.f32 %v298
    %vm305 = vweird.f32 %v299
    %vm306 = vmor %vm304, %vm305
    %v307 = vsel %vm306, %v299, %v303
    %v308 = vand.u32 2147483647, %v298
    %vm309 = vcmp.eq.f32.partialorder %v308, 8.507059e+37
    %v310 = vand.u32 %v298, 2147483648
    %v311 = vor.u32 1.1754944e-38, %v310
    %v312 = vsel %vm309, %v311, %v307
    %v313 = vmul.f32 %v288, %v312
    %v314 = vmin.f32 %v313, 1.0
    %v315 = vmax.f32 %v314, -1.0
    %v316 = vadd.f32 %v275, 1.0
    %v317 = vadd.f32 %v315, 1.0
    %v318 = vmul.f32 %v232, %v316
    %v319 = vmul.f32 %v233, %v317
    %v320 = vpack.c.bf16 %v319, %v318
    %v321 = vld [vmem:[#allocation8] sm:$0xff]
    %v322 = vld [vmem:[#allocation8 + $0x8] sm:$0xff]
    %v323 = vld [vmem:[#allocation8 + $0x10] sm:$0xff]
    %v324 = vld [vmem:[#allocation8 + $0x18] sm:$0xff]
    %v325 = vld [vmem:[#allocation8 + $0x20] sm:$0xff]
    %v326 = vld [vmem:[#allocation8 + $0x28] sm:$0xff]
    %v327 = vld [vmem:[#allocation8 + $0x30] sm:$0xff]
    %v328 = vld [vmem:[#allocation8 + $0x38] sm:$0xff]
    %v329 = vld [vmem:[#allocation8 + $0x40] sm:$0xff]
    %v330 = vld [vmem:[#allocation8 + $0x48] sm:$0xff]
    %v331 = vld [vmem:[#allocation8 + $0x50] sm:$0xff]
    %v332 = vld [vmem:[#allocation8 + $0x58] sm:$0xff]
    %v333 = vld [vmem:[#allocation8 + $0x60] sm:$0xff]
    %v334 = vld [vmem:[#allocation8 + $0x68] sm:$0xff]
    %v335 = vld [vmem:[#allocation8 + $0x70] sm:$0xff]
    %v336 = vld [vmem:[#allocation8 + $0x78] sm:$0xff]
    %v338 = vperm.slane %v98, 0
    %v339 = vperm.slane %v98, 4
    %v342 = vperm.slane %v338, 0
    %v343 = vperm.slane %v339, 0
    %v360 = vunpack.c.l.b16 %v321
    %v361 = vunpack.c.h.b16 %v321
    %v362 = vunpack.c.l.b16 %v322
    %v363 = vunpack.c.h.b16 %v322
    %v364 = vunpack.c.l.b16 %v323
    %v365 = vunpack.c.h.b16 %v323
    %v366 = vunpack.c.l.b16 %v324
    %v367 = vunpack.c.h.b16 %v324
    %v368 = vunpack.c.l.b16 %v325
    %v369 = vunpack.c.h.b16 %v325
    %v370 = vunpack.c.l.b16 %v326
    %v371 = vunpack.c.h.b16 %v326
    %v372 = vunpack.c.l.b16 %v327
    %v373 = vunpack.c.h.b16 %v327
    %v374 = vunpack.c.l.b16 %v328
    %v375 = vunpack.c.h.b16 %v328
    %v376 = vunpack.c.l.b16 %v329
    %v377 = vunpack.c.h.b16 %v329
    %v378 = vunpack.c.l.b16 %v330
    %v379 = vunpack.c.h.b16 %v330
    %v380 = vunpack.c.l.b16 %v331
    %v381 = vunpack.c.h.b16 %v331
    %v382 = vunpack.c.l.b16 %v332
    %v383 = vunpack.c.h.b16 %v332
    %v384 = vunpack.c.l.b16 %v333
    %v385 = vunpack.c.h.b16 %v333
    %v386 = vunpack.c.l.b16 %v334
    %v387 = vunpack.c.h.b16 %v334
    %v388 = vunpack.c.l.b16 %v335
    %v389 = vunpack.c.h.b16 %v335
    %v390 = vunpack.c.l.b16 %v336
    %v391 = vunpack.c.h.b16 %v336
    %v392 = vpack.c.b16 %v362, %v360
    %v393 = vpack.c.b16 %v363, %v361
    %v394 = vpack.c.b16 %v366, %v364
    %v395 = vpack.c.b16 %v367, %v365
    %v396 = vpack.c.b16 %v370, %v368
    %v397 = vpack.c.b16 %v371, %v369
    %v398 = vpack.c.b16 %v374, %v372
    %v399 = vpack.c.b16 %v375, %v373
    %v400 = vpack.c.b16 %v378, %v376
    %v401 = vpack.c.b16 %v379, %v377
    %v402 = vpack.c.b16 %v382, %v380
    %v403 = vpack.c.b16 %v383, %v381
    %v404 = vpack.c.b16 %v386, %v384
    %v405 = vpack.c.b16 %v387, %v385
    %v406 = vpack.c.b16 %v390, %v388
    %v407 = vpack.c.b16 %v391, %v389
    %424 = vmatpush.bf16.msra.mxu0 %v406
    %425 = vmatpush.bf16.msra.mxu0 %v404
    %426 = vmatpush.bf16.msra.mxu0 %v402
    %427 = vmatpush.bf16.msra.mxu0 %v400
    %428 = vmatpush.bf16.msra.mxu0 %v398
    %429 = vmatpush.bf16.msra.mxu0 %v396
    %430 = vmatpush.bf16.msra.mxu0 %v394
    %431 = vmatpush.bf16.msra.mxu0 %v392
    %432 = vmatmul.bf16.gmra.mxu0 %v320
    %v433 = vpop.f32.mrf.mxu0
    %v434 = vadd.f32 %v342, %v433
    %v435 = vpop.f32.mrf.mxu0
    %v436 = vadd.f32 %v342, %v435
    %437 = vdwg.mxu0
    %438 = vmatpush.bf16.msra.mxu0 %v407
    %439 = vmatpush.bf16.msra.mxu0 %v405
    %440 = vmatpush.bf16.msra.mxu0 %v403
    %441 = vmatpush.bf16.msra.mxu0 %v401
    %442 = vmatpush.bf16.msra.mxu0 %v399
    %443 = vmatpush.bf16.msra.mxu0 %v397
    %444 = vmatpush.bf16.msra.mxu0 %v395
    %445 = vmatpush.bf16.msra.mxu0 %v393
    %446 = vmatmul.bf16.gmra.mxu0 %v320
    %v447 = vpop.f32.mrf.mxu0
    %v448 = vadd.f32 %v343, %v447
    %v449 = vpop.f32.mrf.mxu0
    %v450 = vadd.f32 %v343, %v449
    %451 = vdwg.mxu0
    %v452 = vadd.f32 %v434, %v448
    %453 = vadd.xlane.f32.xlu0 %v452
    %v454 = vpop.xlane.xlu0 %453
    %v455 = vadd.f32 %v436, %v450
    %456 = vadd.xlane.f32.xlu0 %v455
    %v457 = vpop.xlane.xlu0 %456
    %v458 = vrcp.pop 256.0
    %v459 = vmul.f32 256.0, %v458
    %v460 = vsub.f32 1.0, %v459
    %v461 = vmul.f32 %v458, %v460
    %v462 = vadd.f32 %v458, %v461
    %vm463 = vweird.f32 %v458
    %v464 = vsel %vm463, %v458, %v462
    %v465 = vmul.f32 %v454, %v464
    %v466 = vmul.f32 %v457, %v464
    %v467 = vsub.f32 %v434, %v465
    %v468 = vsub.f32 %v448, %v465
    %v469 = vsub.f32 %v436, %v466
    %v470 = vsub.f32 %v450, %v466
    %v471 = vmul.f32 %v467, %v467
    %v472 = vmul.f32 %v468, %v468
    %v473 = vmul.f32 %v469, %v469
    %v474 = vmul.f32 %v470, %v470
    %v475 = vadd.f32 %v471, %v472
    %476 = vadd.xlane.f32.xlu0 %v475
    %v477 = vpop.xlane.xlu0 %476
    %v478 = vadd.f32 %v473, %v474
    %479 = vadd.xlane.f32.xlu0 %v478
    %v480 = vpop.xlane.xlu0 %479
    %v481 = vmul.f32 %v477, %v464
    %v482 = vmul.f32 %v480, %v464
    %v483 = vadd.f32 %v481, 1e-05
    %v484 = vadd.f32 %v482, 1e-05
    %v485 = vrsqrt.pop %v483
    %v486 = vmul.f32 %v485, %v483
    %v487 = vmul.f32 %v486, %v485
    %v488 = vmul.f32 0.5, %v487
    %v489 = vsub.f32 1.5, %v488
    %v490 = vmul.f32 %v485, %v489
    %vm491 = vweird.f32 %v483
    %vm492 = vweird.f32 %v485
    %vm493 = vmor %vm491, %vm492
    %v494 = vsel %vm493, %v485, %v490
    %v495 = vrsqrt.pop %v484
    %v496 = vmul.f32 %v495, %v484
    %v497 = vmul.f32 %v496, %v495
    %v498 = vmul.f32 0.5, %v497
    %v499 = vsub.f32 1.5, %v498
    %v500 = vmul.f32 %v495, %v499
    %vm501 = vweird.f32 %v484
    %vm502 = vweird.f32 %v495
    %vm503 = vmor %vm501, %vm502
    %v504 = vsel %vm503, %v495, %v500
    %v505 = vmul.f32 %v467, %v494
    %v506 = vmul.f32 %v468, %v494
    %v507 = vmul.f32 %v469, %v504
    %v508 = vmul.f32 %v470, %v504
    %v509 = vperm.slane %v98, 1
    %v510 = vperm.slane %v98, 5
    %v513 = vperm.slane %v509, 1
    %v514 = vperm.slane %v510, 1
    %v515 = vmul.f32 %v505, %v513
    %v516 = vmul.f32 %v506, %v514
    %v517 = vmul.f32 %v507, %v513
    %v518 = vmul.f32 %v508, %v514
    %v519 = vperm.slane %v98, 2
    %v520 = vperm.slane %v98, 6
    %v523 = vperm.slane %v519, 2
    %v524 = vperm.slane %v520, 2
    %v525 = vadd.f32 %v515, %v523
    %v526 = vadd.f32 %v516, %v524
    %v527 = vadd.f32 %v517, %v523
    %v528 = vadd.f32 %v518, %v524
    %529 = vst [vmem:[#allocation11] sm:$0xff] %v525
    %530 = vst [vmem:[#allocation11 + $0x8] sm:$0xff] %v526
    %531 = vst [vmem:[#allocation11 + $0x10] sm:$0xff] %v527
    %532 = vst [vmem:[#allocation11 + $0x18] sm:$0xff] %v528
    // Predicated region
    $region42: #{tpu_custom_call.1} parent=1 // pred_check
      _
    $region43: #{tpu_custom_call.1} parent=1 // pred_check_branch
      %534 = sbr.rel (0) target = $region45
    $region44: #{tpu_custom_call.1} parent=1 // pred_region
      %536 = vsyncadd [#allocation4], 0
      %s537 = sshll.u32 [#allocation11], 4
      %s538 = int_to_ptr.vmem [resolvable:$true] %s537
      %s539 = sshll.u32 %s5, 4
      %s540 = int_to_ptr.hbm [resolvable:$true] %s539
      %545 = dma.vmem_to_hbm [thread:$0]  %s538, 512, %s540, [#allocation4], 256, 256, 16
    $region45: #{tpu_custom_call.1} parent=1 // pred_fallthru
      _
    // Predicated region
    $region46: #{tpu_custom_call.1} parent=1 // pred_check
      _
    $region47: #{tpu_custom_call.1} parent=1 // pred_check_branch
      %547 = sbr.rel (0) target = $region49
    $region48: #{tpu_custom_call.1} parent=1 // pred_region
      %549 = dma.done [#allocation4], 512
    $region49: #{tpu_custom_call.1} parent=1 // pred_fallthru
      _
    %550 = vsyncpa [#allocation3], 1
    %551 = vsyncpa [#allocation6], 1
    %552 = vsyncpa [#allocation9], 1
    %553 = vsyncpa [#allocation4], 1

</llo_original>
